<compile_context>
chip_gen: v7x
topology: tpu7x:2x2x1
jax: 0.10.0
libtpu: 0.0.40
codegen_flags: <defaults>
</compile_context>

<pallas_src>
import jax
import jax.numpy as jnp
from jax.experimental import pallas as pl
from jax.experimental.pallas import tpu as pltpu


# ---------------------------------------------------------------------------
# shared gate math
# ---------------------------------------------------------------------------
def _gate_mask(shape, hdim):
    """Lane mask selecting the g-gate (tanh) columns of a (B, 4H) gate block."""
    lane = jax.lax.broadcasted_iota(jnp.int32, shape, dimension=1)
    return jnp.logical_and(lane >= 2 * hdim, lane < 3 * hdim)


def _lstm_epilogue(gates, c_prev, hdim, is_g):
    """gates: (B, 4H) f32 in LSTMCell order [i|f|g|o] -> (h_new, c_new)."""
    # One sigmoid pass + one tanh pass over the full (B, 4H) vreg, gate
    # selection via a lane-mask VPU select; then cheap per-gate extracts.
    act = jnp.where(is_g, jnp.tanh(gates), jax.nn.sigmoid(gates))
    i = act[:, 0 * hdim:1 * hdim]
    f = act[:, 1 * hdim:2 * hdim]
    g = act[:, 2 * hdim:3 * hdim]
    o = act[:, 3 * hdim:4 * hdim]
    c_new = i * g if c_prev is None else f * c_prev + i * g
    h_new = o * jnp.tanh(c_new)
    return h_new, c_new


# ---------------------------------------------------------------------------
# kernels
# ---------------------------------------------------------------------------
def _tracker_step0_kernel(x_ref, w_ref, b_ref, hc_ref):
    """First call (state is None): h0 = c0 = 0 -> single K=3*size matmul."""
    hdim = hc_ref.shape[1] // 2
    gates = (jnp.dot(x_ref[...], w_ref[...], preferred_element_type=jnp.float32)
             + b_ref[...])
    is_g = _gate_mask(gates.shape, hdim)
    h_new, c_new = _lstm_epilogue(gates, None, hdim, is_g)
    hc_ref[...] = jnp.concatenate([h_new, c_new], axis=1).astype(hc_ref.dtype)


def _tracker_step_kernel(xh_ref, c0_ref, w_ref, b_ref, hc_ref):
    """General single step: x and h0 pre-concatenated -> ONE K=3*size+H matmul."""
    hdim = hc_ref.shape[1] // 2
    gates = (jnp.dot(xh_ref[...], w_ref[...], preferred_element_type=jnp.float32)
             + b_ref[...])
    is_g = _gate_mask(gates.shape, hdim)
    h_new, c_new = _lstm_epilogue(gates, c0_ref[...], hdim, is_g)
    hc_ref[...] = jnp.concatenate([h_new, c_new], axis=1).astype(hc_ref.dtype)


def _tracker_fused_kernel(x_seq_ref, hc0_ref, wx_ref, whh_ref, b_ref,
                          hc_seq_ref):
    """T tracker steps fully VMEM-resident: in-kernel time loop, (h, c) carried
    as loop values, one lane-dense (B, 2H) store per step."""
    T = x_seq_ref.shape[0]
    B = x_seq_ref.shape[1]
    hdim = hc_seq_ref.shape[2] // 2

    # Hoisted out of the per-step body (JAX does not CSE iota/broadcast).
    is_g = _gate_mask((B, 4 * hdim), hdim)
    wx = wx_ref[...]
    whh = whh_ref[...]
    b = b_ref[...]

    h0 = hc0_ref[:, 0 * hdim:1 * hdim].astype(jnp.float32)
    c0 = hc0_ref[:, 1 * hdim:2 * hdim].astype(jnp.float32)

    def body(t, carry):
        h, c = carry
        gates = (jnp.dot(x_seq_ref[t], wx, preferred_element_type=jnp.float32)
                 + jnp.dot(h, whh, preferred_element_type=jnp.float32)
                 + b)
        h_new, c_new = _lstm_epilogue(gates, c, hdim, is_g)
        hc_seq_ref[t] = jnp.concatenate([h_new, c_new],
                                        axis=1).astype(hc_seq_ref.dtype)
        return h_new, c_new

    jax.lax.fori_loop(0, T, body, (h0, c0), unroll=True)


# ---------------------------------------------------------------------------
# parameters
# ---------------------------------------------------------------------------
def tracker_init_params(key, size, tracker_size, dtype=jnp.float32):
    """PyTorch-style LSTMCell(3*size, H) init, rearranged for the kernels."""
    H = tracker_size
    k1, k2, k3, k4 = jax.random.split(key, 4)
    bound = 1.0 / float(H) ** 0.5
    w_ih = jax.random.uniform(k1, (4 * H, 3 * size), dtype, -bound, bound)
    w_hh = jax.random.uniform(k2, (4 * H, H), dtype, -bound, bound)
    b_ih = jax.random.uniform(k3, (4 * H,), dtype, -bound, bound)
    b_hh = jax.random.uniform(k4, (4 * H,), dtype, -bound, bound)

    w_ih_t = w_ih.T                                   # (3*size, 4H)
    w_hh_t = w_hh.T                                   # (H, 4H)
    bias = (b_ih + b_hh).reshape(1, 4 * H)
    return {
        "w_x": w_ih_t,                                # (3*size, 4H)
        "w_hh": w_hh_t,                               # (H, 4H)
        "w_xh": jnp.concatenate([w_ih_t, w_hh_t], axis=0),  # (3*size+H, 4H)
        "bias": bias,                                 # (1, 4H)
        # raw layout kept only for the pure-JAX reference check
        "ref": {"w_ih_t": w_ih_t, "w_hh_t": w_hh_t, "bias": bias},
    }


# ---------------------------------------------------------------------------
# wrappers
# ---------------------------------------------------------------------------
def _full_spec(shp):
    return pl.BlockSpec(shp, lambda i: (0,) * len(shp))


def tracker_forward(bufs, stacks, params, size, tracker_size, state=None):
    """Mirrors Tracker.forward for one step.

    Returns (list of B arrays of shape (1, 2*H)  [== _unbundle(state)],
             new_state = (h, c) each (B, H)).
    """
    # _bundle(...)[0]: concat along batch, take the h-half of the bundled rows.
    buf2 = jnp.concatenate([b[-1] for b in bufs], axis=0)      # (B, 2*size)
    s12 = jnp.concatenate([s[-1] for s in stacks], axis=0)     # (B, 2*size)
    s22 = jnp.concatenate([s[-2] for s in stacks], axis=0)     # (B, 2*size)
    x = jnp.concatenate([buf2[:, :size], s12[:, :size], s22[:, :size]],
                        axis=1)                                 # (B, 3*size)

    B = x.shape[0]
    H = tracker_size
    dtype = x.dtype
    out_shape = jax.ShapeDtypeStruct((B, 2 * H), dtype)
    out_spec = _full_spec((B, 2 * H))
    cparams = pltpu.CompilerParams(dimension_semantics=("arbitrary",))

    if state is None:
        hc = pl.pallas_call(
            _tracker_step0_kernel,
            out_shape=out_shape,
            grid=(1,),
            in_specs=[_full_spec((B, 3 * size)),
                      _full_spec((3 * size, 4 * H)),
                      _full_spec((1, 4 * H))],
            out_specs=out_spec,
            compiler_params=cparams,
        )(x, params["w_x"], params["bias"])
    else:
        h0, c0 = state
        xh = jnp.concatenate([x, h0], axis=1)                   # (B, 3*size+H)
        hc = pl.pallas_call(
            _tracker_step_kernel,
            out_shape=out_shape,
            grid=(1,),
            in_specs=[_full_spec((B, 3 * size + H)),
                      _full_spec((B, H)),
                      _full_spec((3 * size + H, 4 * H)),
                      _full_spec((1, 4 * H))],
            out_specs=out_spec,
            compiler_params=cparams,
        )(xh, c0, params["w_xh"], params["bias"])

    new_state = (hc[:, :H], hc[:, H:])
    unbundled = list(jnp.split(hc, B, axis=0))                  # _unbundle
    return unbundled, new_state


def tracker_forward_fused(buf_seq, s1_seq, s2_seq, params, size, tracker_size,
                          initial_state=None):
    """T consecutive tracker steps in ONE fully VMEM-resident pallas_call.

    buf_seq/s1_seq/s2_seq: (T, B, 2*size) pre-gathered bundled tops per step.
    initial_state: optional (h0, c0) each (B, H); defaults to zeros (reset).
    Returns hc_seq of shape (T, B, 2*H) with h in lanes [0:H], c in [H:2H].
    """
    # TODO(synk): the dynamic shift/reduce bookkeeping that selects stack/
    # buffer tops each step is host-side Python in the original SPINN; here
    # the per-step tops must be pre-gathered into dense (T, B, 2*size) arrays.
    T, B, _ = buf_seq.shape
    H = tracker_size
    dtype = buf_seq.dtype

    x_seq = jnp.concatenate([buf_seq[..., :size], s1_seq[..., :size],
                             s2_seq[..., :size]], axis=-1)      # (T, B, 3*size)
    if initial_state is None:
        hc0 = jnp.zeros((B, 2 * H), dtype)
    else:
        hc0 = jnp.concatenate(initial_state, axis=1)

    hc_seq = pl.pallas_call(
        _tracker_fused_kernel,
        out_shape=jax.ShapeDtypeStruct((T, B, 2 * H), dtype),
        grid=(1,),
        in_specs=[_full_spec((T, B, 3 * size)),
                  _full_spec((B, 2 * H)),
                  _full_spec((3 * size, 4 * H)),
                  _full_spec((H, 4 * H)),
                  _full_spec((1, 4 * H))],
        out_specs=_full_spec((T, B, 2 * H)),
        compiler_params=pltpu.CompilerParams(
            dimension_semantics=("arbitrary",)),
    )(x_seq, hc0, params["w_x"], params["w_hh"], params["bias"])
    return hc_seq


# ---------------------------------------------------------------------------
# pure-JAX reference (torch.nn.LSTMCell semantics)
# ---------------------------------------------------------------------------
def _lstm_cell_ref(x, h, c, ref_p, H):
    gates = x @ ref_p["w_ih_t"] + h @ ref_p["w_hh_t"] + ref_p["bias"]
    i = jax.nn.sigmoid(gates[:, 0 * H:1 * H])
    f = jax.nn.sigmoid(gates[:, 1 * H:2 * H])
    g = jnp.tanh(gates[:, 2 * H:3 * H])
    o = jax.nn.sigmoid(gates[:, 3 * H:4 * H])
    c2 = f * c + i * g
    h2 = o * jnp.tanh(c2)
    return h2, c2


def _tracker_ref(buf2, s12, s22, state, ref_p, size, H):
    x = jnp.concatenate([buf2[:, :size], s12[:, :size], s22[:, :size]], axis=1)
    B = x.shape[0]
    if state is None:
        state = (jnp.zeros((B, H), x.dtype), jnp.zeros((B, H), x.dtype))
    return _lstm_cell_ref(x, state[0], state[1], ref_p, H)


# ---------------------------------------------------------------------------
# demo / correctness check
# ---------------------------------------------------------------------------
if __name__ == "__main__":
    SIZE = 32          # per-element hidden half-size ("size" arg of Tracker)
    H = 32             # tracker_size (LSTMCell hidden size); 4H = 128 lanes
    B = 2              # batch
    SEQ = 4            # entries per buffer / stack (only last 1-2 used)
    T = 8              # timesteps for the fused variant

    key = jax.random.PRNGKey(0)
    kp, kd, ks = jax.random.split(key, 3)
    params = tracker_init_params(kp, SIZE, H)

    # Module-style inputs: per example, a list of bundled (1, 2*size) states.
    dkeys = jax.random.split(kd, 2 * B * SEQ)
    bufs = [[jax.random.normal(dkeys[b * SEQ + t], (1, 2 * SIZE), jnp.float32)
             for t in range(SEQ)] for b in range(B)]
    stacks = [[jax.random.normal(dkeys[B * SEQ + b * SEQ + t], (1, 2 * SIZE),
                                 jnp.float32)
               for t in range(SEQ)] for b in range(B)]

    # --- single-step forward: first call (state=None) then a carried-state call
    outs1, state1 = tracker_forward(bufs, stacks, params, SIZE, H, state=None)
    outs2, state2 = tracker_forward(bufs, stacks, params, SIZE, H, state=state1)
    got1 = jax.block_until_ready(jnp.concatenate(outs1, axis=0))   # (B, 2H)
    got2 = jax.block_until_ready(jnp.concatenate(outs2, axis=0))

    buf2 = jnp.concatenate([b[-1] for b in bufs], axis=0)
    s12 = jnp.concatenate([s[-1] for s in stacks], axis=0)
    s22 = jnp.concatenate([s[-2] for s in stacks], axis=0)
    rh1, rc1 = _tracker_ref(buf2, s12, s22, None, params["ref"], SIZE, H)
    rh2, rc2 = _tracker_ref(buf2, s12, s22, (rh1, rc1), params["ref"], SIZE, H)

    assert got1.shape == (B, 2 * H)
    assert jnp.allclose(got1, jnp.concatenate([rh1, rc1], axis=1),
                        atol=2e-5, rtol=2e-5)
    assert jnp.allclose(got2, jnp.concatenate([rh2, rc2], axis=1),
                        atol=2e-5, rtol=2e-5)

    # --- fused multi-step forward over T steps in one pallas_call
    skeys = jax.random.split(ks, 3)
    buf_seq = jax.random.normal(skeys[0], (T, B, 2 * SIZE), jnp.float32)
    s1_seq = jax.random.normal(skeys[1], (T, B, 2 * SIZE), jnp.float32)
    s2_seq = jax.random.normal(skeys[2], (T, B, 2 * SIZE), jnp.float32)
    hc_seq = tracker_forward_fused(buf_seq, s1_seq, s2_seq, params, SIZE, H)
    hc_seq = jax.block_until_ready(hc_seq)

    st = None
    for t in range(T):
        st = _tracker_ref(buf_seq[t], s1_seq[t], s2_seq[t], st,
                          params["ref"], SIZE, H)
        assert jnp.allclose(hc_seq[t, :, :H], st[0], atol=2e-5, rtol=2e-5)
        assert jnp.allclose(hc_seq[t, :, H:], st[1], atol=2e-5, rtol=2e-5)

    # --- fused variant resuming from a carried state (chaining segments)
    hc_seq2 = tracker_forward_fused(buf_seq, s1_seq, s2_seq, params, SIZE, H,
                                    initial_state=st)
    hc_seq2 = jax.block_until_ready(hc_seq2)
    st2 = st
    for t in range(T):
        st2 = _tracker_ref(buf_seq[t], s1_seq[t], s2_seq[t], st2,
                           params["ref"], SIZE, H)
        assert jnp.allclose(hc_seq2[t, :, :H], st2[0], atol=2e-5, rtol=2e-5)
        assert jnp.allclose(hc_seq2[t, :, H:], st2[1], atol=2e-5, rtol=2e-5)

    print("KERNEL_OK")
</pallas_src>

<mosaic_0001>
module attributes {stable_mosaic.version = 11 : i64} {
  func.func @_tracker_step0_kernel(%arg0: i32, %arg1: memref<2x96xf32, #tpu.memory_space<vmem>>, %arg2: memref<96x128xf32, #tpu.memory_space<vmem>>, %arg3: memref<1x128xf32, #tpu.memory_space<vmem>>, %arg4: memref<2x64xf32, #tpu.memory_space<vmem>>) attributes {dimension_semantics = [#tpu.dimension_semantics<arbitrary>], iteration_bounds = array<i64: 1>, scalar_prefetch = 0 : i64, scratch_operands = 0 : i64, tpu.core_type = #tpu.core_type<tc>, window_params = [{pipeline_mode = #tpu.pipeline_mode<synchronous>, transform_indices = @transform_0, window_bounds = array<i64: 2, 96>}, {pipeline_mode = #tpu.pipeline_mode<synchronous>, transform_indices = @transform_1, window_bounds = array<i64: 96, 128>}, {pipeline_mode = #tpu.pipeline_mode<synchronous>, transform_indices = @transform_2, window_bounds = array<i64: 1, 128>}, {pipeline_mode = #tpu.pipeline_mode<synchronous>, transform_indices = @transform_3, window_bounds = array<i64: 2, 64>}]} {
    %c0 = arith.constant 0 : index
    %c0_0 = arith.constant 0 : index
    %0 = vector.load %arg1[%c0, %c0_0] : memref<2x96xf32, #tpu.memory_space<vmem>>, vector<2x96xf32>
    %c0_1 = arith.constant 0 : index
    %c0_2 = arith.constant 0 : index
    %1 = vector.load %arg2[%c0_1, %c0_2] : memref<96x128xf32, #tpu.memory_space<vmem>>, vector<96x128xf32>
    %cst = arith.constant dense<0.000000e+00> : vector<2x128xf32>
    %2 = tpu.matmul %0, %1, %cst {dimension_numbers = #tpu.dot_dimension_numbers<[1], [0], [0], [1], [0, 0, 1, 1], [], []>} : vector<2x96xf32>, vector<96x128xf32>, vector<2x128xf32> -> vector<2x128xf32>
    %c0_3 = arith.constant 0 : index
    %c0_4 = arith.constant 0 : index
    %3 = vector.load %arg3[%c0_3, %c0_4] : memref<1x128xf32, #tpu.memory_space<vmem>>, vector<1x128xf32>
    %4 = vector.broadcast %3 : vector<1x128xf32> to vector<2x128xf32>
    %5 = arith.addf %2, %4 : vector<2x128xf32>
    %6 = tpu.iota {dimensions = array<i32: 1>} : vector<2x128xi32>
    %c64_i32 = arith.constant 64 : i32
    %7 = vector.broadcast %c64_i32 : i32 to vector<2x128xi32>
    %8 = arith.cmpi sge, %6, %7 : vector<2x128xi32>
    %c96_i32 = arith.constant 96 : i32
    %9 = vector.broadcast %c96_i32 : i32 to vector<2x128xi32>
    %10 = arith.cmpi slt, %6, %9 : vector<2x128xi32>
    %11 = arith.andi %8, %10 : vector<2x128xi1>
    %12 = math.tanh %5 : vector<2x128xf32>
    %13 = arith.negf %5 : vector<2x128xf32>
    %14 = math.exp %13 : vector<2x128xf32>
    %cst_5 = arith.constant 1.000000e+00 : f32
    %15 = vector.broadcast %cst_5 : f32 to vector<2x128xf32>
    %16 = arith.addf %15, %14 : vector<2x128xf32>
    %17 = arith.divf %15, %16 : vector<2x128xf32>
    %18 = arith.select %11, %12, %17 : vector<2x128xi1>, vector<2x128xf32>
    %19 = vector.extract_strided_slice %18 {offsets = [0, 0], sizes = [2, 32], strides = [1, 1]} : vector<2x128xf32> to vector<2x32xf32>
    %20 = vector.extract_strided_slice %18 {offsets = [0, 64], sizes = [2, 32], strides = [1, 1]} : vector<2x128xf32> to vector<2x32xf32>
    %21 = vector.extract_strided_slice %18 {offsets = [0, 96], sizes = [2, 32], strides = [1, 1]} : vector<2x128xf32> to vector<2x32xf32>
    %22 = arith.mulf %19, %20 : vector<2x32xf32>
    %23 = math.tanh %22 : vector<2x32xf32>
    %24 = arith.mulf %21, %23 : vector<2x32xf32>
    %25 = tpu.concatenate %24, %22 in 1 : vector<2x32xf32>, vector<2x32xf32> -> vector<2x64xf32>
    %c0_6 = arith.constant 0 : index
    %c0_7 = arith.constant 0 : index
    %26 = vector.load %arg4[%c0_6, %c0_7] : memref<2x64xf32, #tpu.memory_space<vmem>>, vector<2x64xf32>
    tpu.vector_store %arg4[%c0_6, %c0_7], %25 {strides = array<i32>} : memref<2x64xf32, #tpu.memory_space<vmem>>, vector<2x64xf32>,
    return
  }
  func.func @transform_0(%arg0: i32) -> (i32, i32) {
    %c0_i32 = arith.constant 0 : i32
    %c0_i32_0 = arith.constant 0 : i32
    %c0_i32_1 = arith.constant 0 : i32
    return %c0_i32, %c0_i32_0 : i32, i32
  }
  func.func @transform_1(%arg0: i32) -> (i32, i32) {
    %c0_i32 = arith.constant 0 : i32
    %c0_i32_0 = arith.constant 0 : i32
    %c0_i32_1 = arith.constant 0 : i32
    return %c0_i32, %c0_i32_0 : i32, i32
  }
  func.func @transform_2(%arg0: i32) -> (i32, i32) {
    %c0_i32 = arith.constant 0 : i32
    %c0_i32_0 = arith.constant 0 : i32
    %c0_i32_1 = arith.constant 0 : i32
    return %c0_i32, %c0_i32_0 : i32, i32
  }
  func.func @transform_3(%arg0: i32) -> (i32, i32) {
    %c0_i32 = arith.constant 0 : i32
    %c0_i32_0 = arith.constant 0 : i32
    %c0_i32_1 = arith.constant 0 : i32
    return %c0_i32, %c0_i32_0 : i32, i32
  }
}

</mosaic_0001>

<llo_original>
// kernel: tpu_custom_call.1
$region0: #{tpu_custom_call.1}
  #allocation0 [shape = 'u32[]', space=smem, size = 0x4, offset = 0x4, fixed_abs, tag = 'smem constant byte address 0x4 - core index']
  #allocation1 [shape = 'u32[144,128]{1,0:T(1,128)}', space=vmem, size = 0x12000, scoped, tag = 'internal scratch']
  %s0 = inlined_call_operand.hbm [shape: f32[2,96], index: 0, kind: input, shape index: {}]
  %s1 = inlined_call_operand.hbm [shape: f32[96,128], index: 1, kind: input, shape index: {}]
  %s2 = inlined_call_operand.vmem [shape: f32[1,128], index: 2, kind: input, shape index: {}]
  %s3 = inlined_call_operand.hbm [shape: f32[2,64], index: 3, kind: output, shape index: {}]
  %s4 = sld [smem:[#allocation0]]
  $region30: #{tpu_custom_call.1} parent=0
    _
  %s6 = ssub.s32 1, %s4
  %s7 = scalar_select 0, %s6, %s4
  $region1: #{tpu_custom_call.1} parent=0
    #allocation2 [shape = 'u8[1024]{0}', space=vmem, size = 0x400, scoped, tag = 'input window, operand 0, single buffered']
    #allocation3 [shape = 's32[1]{0}', space=sflag, size = 0x4, scoped, tag = 'scoped memory for tpu_custom_call.1']
    #allocation4 [shape = 's32[1]{0}', space=sflag, size = 0x4, scoped, tag = 'scoped memory for tpu_custom_call.1']
    #allocation5 [shape = 'u8[49152]{0}', space=vmem, size = 0xc000, scoped, tag = 'input window, operand 1, single buffered']
    #allocation6 [shape = 's32[1]{0}', space=sflag, size = 0x4, scoped, tag = 'scoped memory for tpu_custom_call.1']
    #allocation7 [shape = 'u8[1024]{0}', space=vmem, size = 0x400, scoped, tag = 'output window, operand 0, single buffered']
    %8 = vsyncpa [#allocation3], 0
    %9 = vsyncpa [#allocation6], 0
    %10 = vsyncpa [#allocation4], 0
    // Predicated region
    $region2: #{tpu_custom_call.1} parent=1 // pred_check
      _
    $region3: #{tpu_custom_call.1} parent=1 // pred_check_branch
      %12 = sbr.rel (0) target = $region5
    $region4: #{tpu_custom_call.1} parent=1 // pred_region
      %s14 = ssub.s32 32, 32
      %15 = vsyncadd [#allocation3], %s14
      %s17 = sshll.u32 [#allocation2], 4
      %s18 = int_to_ptr.vmem [resolvable:$true] %s17
      %20 = dma.hbm_to_vmem [thread:$0]  %s0, 32, %s18, [#allocation3]
    $region5: #{tpu_custom_call.1} parent=1 // pred_fallthru
      _
    // Predicated region
    $region6: #{tpu_custom_call.1} parent=1 // pred_check
      _
    $region7: #{tpu_custom_call.1} parent=1 // pred_check_branch
      %22 = sbr.rel (0) target = $region9
    $region8: #{tpu_custom_call.1} parent=1 // pred_region
      %s24 = ssub.s32 1536, 1536
      %25 = vsyncadd [#allocation6], %s24
      %s26 = sshll.u32 [#allocation5], 4
      %s27 = int_to_ptr.vmem [resolvable:$true] %s26
      %32 = dma.hbm_to_vmem [thread:$0]  %s1, 1536, %s27, [#allocation6], 128, 128, 8
    $region9: #{tpu_custom_call.1} parent=1 // pred_fallthru
      _
    // Predicated region
    $region10: #{tpu_custom_call.1} parent=1 // pred_check
      _
    $region11: #{tpu_custom_call.1} parent=1 // pred_check_branch
      %34 = sbr.rel (0) target = $region13
    $region12: #{tpu_custom_call.1} parent=1 // pred_region
      _
    $region13: #{tpu_custom_call.1} parent=1 // pred_fallthru
      _
    // Predicated region
    $region14: #{tpu_custom_call.1} parent=1 // pred_check
      _
    $region15: #{tpu_custom_call.1} parent=1 // pred_check_branch
      %36 = sbr.rel (0) target = $region17
    $region16: #{tpu_custom_call.1} parent=1 // pred_region
      %37 = dma.done [#allocation3], 32
    $region17: #{tpu_custom_call.1} parent=1 // pred_fallthru
      _
    // Predicated region
    $region18: #{tpu_custom_call.1} parent=1 // pred_check
      _
    $region19: #{tpu_custom_call.1} parent=1 // pred_check_branch
      %39 = sbr.rel (0) target = $region21
    $region20: #{tpu_custom_call.1} parent=1 // pred_region
      %40 = dma.done [#allocation6], 1536
    $region21: #{tpu_custom_call.1} parent=1 // pred_fallthru
      _
    %v41 = vld [vmem:[#allocation2] sm:$0x3]
    %v42 = vld [vmem:[#allocation5] sm:$0xff]
    %v43 = vld [vmem:[#allocation5 + $0x8] sm:$0xff]
    %v44 = vld [vmem:[#allocation5 + $0x10] sm:$0xff]
    %v45 = vld [vmem:[#allocation5 + $0x18] sm:$0xff]
    %v46 = vld [vmem:[#allocation5 + $0x20] sm:$0xff]
    %v47 = vld [vmem:[#allocation5 + $0x28] sm:$0xff]
    %v48 = vld [vmem:[#allocation5 + $0x30] sm:$0xff]
    %v49 = vld [vmem:[#allocation5 + $0x38] sm:$0xff]
    %v50 = vld [vmem:[#allocation5 + $0x40] sm:$0xff]
    %v51 = vld [vmem:[#allocation5 + $0x48] sm:$0xff]
    %v52 = vld [vmem:[#allocation5 + $0x50] sm:$0xff]
    %v53 = vld [vmem:[#allocation5 + $0x58] sm:$0xff]
    %v54 = vld [vmem:[%s2] sm:$0x1]
    %v56 = vlaneseq
    %v57 = vshrl.u32 %v56, 7
    %v58 = vsub.s32 0, %v57
    %v59 = vrot.slane %v54, %v58
    %vm61 = vcmask 785408
    %v63 = vsel %vm61, %v41, 0
    %65 = vmatprep.subr.mxu0 0.0
    %66 = vmatpush1.msra.mxu0 %v42
    %67 = vmatprep.subr.mxu0 0.0
    %68 = vmatpush1.msra.mxu0 %v43
    %69 = vmatprep.subr.mxu0 0.0
    %70 = vmatpush1.msra.mxu0 %v44
    %71 = vmatprep.subr.mxu0 0.0
    %72 = vmatpush1.msra.mxu0 %v45
    %73 = vmatprep.subr.mxu0 0.0
    %74 = vmatpush1.msra.mxu0 %v46
    %75 = vmatprep.subr.mxu0 0.0
    %76 = vmatpush1.msra.mxu0 %v47
    %77 = vmatprep.subr.mxu0 0.0
    %78 = vmatpush1.msra.mxu0 %v48
    %79 = vmatprep.subr.mxu0 0.0
    %80 = vmatpush1.msra.mxu0 %v49
    %81 = vmatprep.subr.mxu0 0.0
    %82 = vmatpush1.msra.mxu0 %v50
    %83 = vmatprep.subr.mxu0 0.0
    %84 = vmatpush1.msra.mxu0 %v51
    %85 = vmatprep.subr.mxu0 0.0
    %86 = vmatpush1.msra.mxu0 %v52
    %87 = vmatprep.subr.mxu0 0.0
    %88 = vmatpush1.msra.mxu0 %v53
    %89 = vmatprep.subr.mxu0 0.0
    %90 = vmatpush1.msra.mxu0 0.0
    %91 = vmatprep.subr.mxu0 0.0
    %92 = vmatpush1.msra.mxu0 0.0
    %93 = vmatprep.subr.mxu0 0.0
    %94 = vmatpush1.msra.mxu0 0.0
    %95 = vmatprep.subr.mxu0 0.0
    %96 = vmatpush1.msra.mxu0 0.0
    %97 = vmatprep.subr.mxu0 0.0
    %98 = vmatpush1.msra.mxu0 0.0
    %99 = vmatprep.subr.mxu0 0.0
    %100 = vmatpush1.msra.mxu0 0.0
    %101 = vmatprep.subr.mxu0 0.0
    %102 = vmatpush1.msra.mxu0 0.0
    %103 = vmatprep.subr.mxu0 0.0
    %104 = vmatpush1.msra.mxu0 0.0
    %105 = vmatprep.subr.mxu0 0.0
    %106 = vmatpush1.msra.mxu0 0.0
    %107 = vmatprep.subr.mxu0 0.0
    %108 = vmatpush1.msra.mxu0 0.0
    %109 = vmatprep.subr.mxu0 0.0
    %110 = vmatpush1.msra.mxu0 0.0
    %111 = vmatprep.subr.mxu0 0.0
    %112 = vmatpush1.msra.mxu0 0.0
    %113 = vmatprep.subr.mxu0 0.0
    %114 = vmatpush1.msra.mxu0 0.0
    %115 = vmatprep.subr.mxu0 0.0
    %116 = vmatpush1.msra.mxu0 0.0
    %117 = vmatprep.subr.mxu0 0.0
    %118 = vmatpush1.msra.mxu0 0.0
    %119 = vmatprep.subr.mxu0 0.0
    %120 = vmatpush1.msra.mxu0 0.0
    %121 = vmatprep.subr.mxu0 0.0
    %122 = vmatpush1.msra.mxu0 0.0
    %123 = vmatprep.subr.mxu0 0.0
    %124 = vmatpush1.msra.mxu0 0.0
    %125 = vmatprep.subr.mxu0 0.0
    %126 = vmatpush1.msra.mxu0 0.0
    %127 = vmatprep.subr.mxu0 0.0
    %128 = vmatpush1.msra.mxu0 0.0
    %129 = vmatprep.mubr.f32.mxu0 0.0
    %130 = vmatmul.mubr.f32.gmra.mrb[0].mxu0 %v63
    %v131 = vpop.f32.mrb[0].mxu0
    %v132 = vadd.f32 %v59, %v131
    %v133 = vpop.f32.mrb[0].mxu0
    %134 = vdwg.mxu0
    %v135 = vlaneseq
    %v136 = vand.u32 %v135, 127
    %vm137 = vcmp.ge.s32.totalorder %v136, 64
    %vm138 = vcmp.lt.s32.totalorder %v136, 96
    %vm139 = vmand %vm137, %vm138
    %v140 = vtanh.pop %v132
    %v141 = vxor.u32 %v132, 2147483648
    %v142 = vmul.f32 %v141, 1.442695
    %v143 = vpow.pop %v142
    %v144 = vadd.f32 %v143, 1.0
    %v145 = vrcp.pop %v144
    %v146 = vmul.f32 1.0, %v145
    %v147 = vsel %vm139, %v140, %v146
    %149 = vrot.lane.b32.xlu0 %v147, 64
    %v150 = vpop.permute.xlu0 %149
    %v152 = vmul.f32 %v147, %v150
    %v153 = vtanh.pop %v152
    %155 = vrot.lane.b32.xlu0 %v153, 96
    %v156 = vpop.permute.xlu0 %155
    %v158 = vmul.f32 %v147, %v156
    %160 = vrot.lane.b32.xlu0 %v158, 32
    %v161 = vpop.permute.xlu0 %160
    %164 = vrot.lane.b32.xlu0 %v152, 32
    %v165 = vpop.permute.xlu0 %164
    %vm167 = vcmask 261120
    %v168 = vsel %vm167, %v161, %v165
    %vm169 = vcmask 517120
    %170 = vst.msk [vmem:[#allocation7] sm:$0x3] %vm169, %v168
    // Predicated region
    $region22: #{tpu_custom_call.1} parent=1 // pred_check
      _
    $region23: #{tpu_custom_call.1} parent=1 // pred_check_branch
      %172 = sbr.rel (0) target = $region25
    $region24: #{tpu_custom_call.1} parent=1 // pred_region
      %s174 = ssub.s32 32, 32
      %175 = vsyncadd [#allocation4], %s174
      %s177 = sshll.u32 [#allocation7], 4
      %s178 = int_to_ptr.vmem [resolvable:$true] %s177
      %180 = dma.vmem_to_hbm [thread:$0]  %s178, 32, %s3, [#allocation4]
    $region25: #{tpu_custom_call.1} parent=1 // pred_fallthru
      _
    // Predicated region
    $region26: #{tpu_custom_call.1} parent=1 // pred_check
      _
    $region27: #{tpu_custom_call.1} parent=1 // pred_check_branch
      %182 = sbr.rel (0) target = $region29
    $region28: #{tpu_custom_call.1} parent=1 // pred_region
      %183 = dma.done [#allocation4], 32
    $region29: #{tpu_custom_call.1} parent=1 // pred_fallthru
      _
    %184 = vsyncpa [#allocation3], 1
    %185 = vsyncpa [#allocation6], 1
    %186 = vsyncpa [#allocation4], 1

</llo_original>
